<compile_context>
chip_gen: v6e
topology: v6e:2x2x1
jax: 0.10.0
libtpu: 0.0.40
codegen_flags: <defaults>
</compile_context>

<pallas_src>
import functools

import jax
import jax.numpy as jnp
from jax import lax
from jax.experimental import pallas as pl
from jax.experimental.pallas import tpu as pltpu

EPS = 1e-5


def _im_loss_kernel(x_ref, ent_out_ref, psum_out_ref, ent_acc, psum_acc, *,
                    n_total, block_rows, blocks_per_split, needs_mask,
                    use_log_free):
    s = pl.program_id(0)          # core-split index ("parallel")
    i = pl.program_id(1)          # streaming reduction index ("arbitrary")

    @pl.when(i == 0)
    def _init():
        ent_acc[...] = jnp.zeros_like(ent_acc)
        psum_acc[...] = jnp.zeros_like(psum_acc)

    x = x_ref[...].astype(jnp.float32)                       # [TN, C]
    tn, _ = x.shape

    # numerically-stable softmax over the class (lane) axis
    x_max = jnp.max(x, axis=1, keepdims=True)                # [TN, 1]
    shifted = x - x_max                                      # [TN, C]
    e = jnp.exp(shifted)                                     # [TN, C]
    denom = jnp.sum(e, axis=1, keepdims=True)                # [TN, 1]
    p = e * pl.reciprocal(denom, approx=False)               # [TN, C]

    if use_log_free:
        # opt-in: log(p) = (x - x_max) - log(denom); one log per ROW instead
        # of one per element.  Shifts the result by <= ~C*eps vs the module.
        ent = -p * (shifted - jnp.log(denom))                # [TN, C]
    else:
        # exact module semantics: -p * log(p + eps)
        ent = -p * jnp.log(p + EPS)                          # [TN, C]

    if needs_mask:
        # rows past the real batch size carry unspecified padding: zero their
        # contribution via a cheap (TN, 1) mask broadcast through the wheres.
        start = (s * blocks_per_split + i) * block_rows
        row_ids = start + lax.broadcasted_iota(jnp.int32, (tn, 1), 0)
        valid = row_ids < n_total                            # [TN, 1]
        ent = jnp.where(valid, ent, 0.0)
        p = jnp.where(valid, p, 0.0)

    # column partial sums only (VPU); cross-lane reduces happen in the wrapper.
    ent_acc[...] += jnp.sum(ent, axis=0, keepdims=True)      # [1, C]
    psum_acc[...] += jnp.sum(p, axis=0, keepdims=True)       # [1, C]

    @pl.when(i == pl.num_programs(1) - 1)
    def _finalize():
        ent_out_ref[0] = ent_acc[...]
        psum_out_ref[0] = psum_acc[...]


def _choose_block_rows(n, c, itemsize):
    """Rows per tile: ~2 MiB of input per pipeline buffer (double-buffered),
    rounded to the dtype's sublane packing; prefer an exact divisor of N near
    the byte target so the ragged-tail mask compiles out."""
    target_bytes = 2 * 1024 * 1024
    mult = {4: 8, 2: 16, 1: 32}.get(itemsize, 8)
    rows = target_bytes // max(1, c * itemsize)
    rows = max(mult, (rows // mult) * mult)
    if rows >= n:
        return n                      # single full-extent block (always legal)
    if n % mult == 0:
        floor_rows = max(mult, ((rows // 4) // mult) * mult)
        r = rows
        while r >= floor_rows:
            if n % r == 0:
                return r              # divisor of N -> no masking
            r -= mult
    return rows


def im_loss(inputs, *, block_rows=None, core_splits=2, use_log_free=False):
    """inputs: [N, C] logits (any float dtype; bf16 recommended on v5e).
    Returns the scalar float32 IM loss."""
    n, c = inputs.shape
    if block_rows is None:
        block_rows = _choose_block_rows(n, c, inputs.dtype.itemsize)
    block_rows = min(block_rows, n)

    total_blocks = pl.cdiv(n, block_rows)
    num_splits = max(1, min(core_splits, total_blocks))
    blocks_per_split = pl.cdiv(total_blocks, num_splits)
    needs_mask = (num_splits * blocks_per_split * block_rows) != n

    kernel = functools.partial(
        _im_loss_kernel,
        n_total=n,
        block_rows=block_rows,
        blocks_per_split=blocks_per_split,
        needs_mask=needs_mask,
        use_log_free=use_log_free,
    )

    def in_map(s, i):
        blk = s * blocks_per_split + i
        # clamp: trailing fully-out-of-range blocks re-read the last block and
        # are zeroed by the in-kernel mask.
        return (jnp.minimum(blk, total_blocks - 1), 0)

    # VMEM budget: double-buffered input + f32 cast/e/p/ent intermediates.
    in_tile_bytes = block_rows * c * inputs.dtype.itemsize
    f32_tile_bytes = block_rows * c * 4
    vmem_limit = int(min(48 * 1024 * 1024,
                         max(32 * 1024 * 1024,
                             2 * in_tile_bytes + 8 * f32_tile_bytes + (1 << 20))))

    ent_sums, p_sums = pl.pallas_call(
        kernel,
        out_shape=(
            jax.ShapeDtypeStruct((num_splits, 1, c), jnp.float32),
            jax.ShapeDtypeStruct((num_splits, 1, c), jnp.float32),
        ),
        grid_spec=pltpu.PrefetchScalarGridSpec(
            num_scalar_prefetch=0,
            grid=(num_splits, blocks_per_split),
            in_specs=[pl.BlockSpec((block_rows, c), in_map)],
            out_specs=[
                pl.BlockSpec((1, 1, c), lambda s, i: (s, 0, 0)),
                pl.BlockSpec((1, 1, c), lambda s, i: (s, 0, 0)),
            ],
            scratch_shapes=[
                pltpu.VMEM((1, c), jnp.float32),   # running sum_n of entropies (per class)
                pltpu.VMEM((1, c), jnp.float32),   # running sum_n of p (per class)
            ],
        ),
        compiler_params=pltpu.CompilerParams(
            dimension_semantics=("parallel", "arbitrary"),
            vmem_limit_bytes=vmem_limit,
        ),
    )(inputs)

    inv_n = jnp.float32(1.0 / n)
    entropy_loss = jnp.sum(ent_sums) * inv_n
    mp = jnp.sum(p_sums, axis=(0, 1)) * inv_n                 # [C]
    gentropy_loss = jnp.sum(-mp * jnp.log(mp + EPS))
    return entropy_loss - gentropy_loss


def _im_loss_ref(inputs):
    # pure-JAX reference mirroring the PyTorch module
    p = jax.nn.softmax(inputs.astype(jnp.float32), axis=1)
    entropy_loss = jnp.mean(jnp.sum(-p * jnp.log(p + EPS), axis=1))
    mp = jnp.mean(p, axis=0)
    gentropy_loss = jnp.sum(-mp * jnp.log(mp + EPS))
    return entropy_loss - gentropy_loss


if __name__ == "__main__":
    key = jax.random.PRNGKey(0)
    k1, k2, k3 = jax.random.split(key, 3)

    # case 1: small module-consistent shape (batch=8, classes=32), single block
    x1 = jax.random.normal(k1, (8, 32), dtype=jnp.float32)
    loss1 = jax.block_until_ready(im_loss(x1))
    ref1 = jax.block_until_ready(_im_loss_ref(x1))
    assert jnp.allclose(loss1, ref1, atol=1e-5, rtol=1e-5), (loss1, ref1)

    # case 2: gridded + ragged-tail mask + 2-way core-split path
    x2 = jax.random.normal(k2, (20, 32), dtype=jnp.float32)
    loss2 = jax.block_until_ready(im_loss(x2, block_rows=8, core_splits=2))
    ref2 = jax.block_until_ready(_im_loss_ref(x2))
    assert jnp.allclose(loss2, ref2, atol=1e-5, rtol=1e-5), (loss2, ref2)

    # case 3: bf16 logits (halved HBM bytes), divisor-tile path, no masking
    x3 = jax.random.normal(k3, (64, 16), dtype=jnp.bfloat16)
    loss3 = jax.block_until_ready(im_loss(x3, block_rows=16))
    ref3 = jax.block_until_ready(_im_loss_ref(x3))
    assert jnp.allclose(loss3, ref3, atol=1e-4, rtol=1e-4), (loss3, ref3)

    # case 4: opt-in log-free entropy path (result shifts by <= ~C*eps)
    loss4 = jax.block_until_ready(im_loss(x2, block_rows=8, use_log_free=True))
    assert jnp.allclose(loss4, ref2, atol=5e-3, rtol=5e-3), (loss4, ref2)

    print("KERNEL_OK")
</pallas_src>

<mosaic_0001>
module attributes {stable_mosaic.version = 11 : i64} {
  func.func @_im_loss_kernel(%arg0: i32, %arg1: i32, %arg2: memref<8x32xf32, #tpu.memory_space<vmem>>, %arg3: memref<1x1x32xf32, #tpu.memory_space<vmem>>, %arg4: memref<1x1x32xf32, #tpu.memory_space<vmem>>, %arg5: memref<1x32xf32, #tpu.memory_space<vmem>>, %arg6: memref<1x32xf32, #tpu.memory_space<vmem>>) attributes {dimension_semantics = [#tpu.dimension_semantics<parallel>, #tpu.dimension_semantics<arbitrary>], iteration_bounds = array<i64: 1, 1>, scalar_prefetch = 0 : i64, scratch_operands = 2 : i64, tpu.core_type = #tpu.core_type<tc>, window_params = [{transform_indices = @transform_0, window_bounds = array<i64: 8, 32>}, {transform_indices = @transform_1, window_bounds = array<i64: 1, 1, 32>}, {transform_indices = @transform_2, window_bounds = array<i64: 1, 1, 32>}]} {
    %c0_i32 = arith.constant 0 : i32
    %0 = arith.cmpi eq, %arg1, %c0_i32 : i32
    %1 = arith.extui %0 : i1 to i32
    %c0_i32_0 = arith.constant 0 : i32
    %2 = arith.cmpi ne, %1, %c0_i32_0 : i32
    scf.if %2 {
      %cst_17 = arith.constant 0.000000e+00 : f32
      %33 = vector.broadcast %cst_17 : f32 to vector<1x32xf32>
      %c0_18 = arith.constant 0 : index
      %c0_19 = arith.constant 0 : index
      %34 = vector.load %arg5[%c0_18, %c0_19] : memref<1x32xf32, #tpu.memory_space<vmem>>, vector<1x32xf32>
      tpu.vector_store %arg5[%c0_18, %c0_19], %33 {strides = array<i32>} : memref<1x32xf32, #tpu.memory_space<vmem>>, vector<1x32xf32>,
      %cst_20 = arith.constant 0.000000e+00 : f32
      %35 = vector.broadcast %cst_20 : f32 to vector<1x32xf32>
      %c0_21 = arith.constant 0 : index
      %c0_22 = arith.constant 0 : index
      %36 = vector.load %arg6[%c0_21, %c0_22] : memref<1x32xf32, #tpu.memory_space<vmem>>, vector<1x32xf32>
      tpu.vector_store %arg6[%c0_21, %c0_22], %35 {strides = array<i32>} : memref<1x32xf32, #tpu.memory_space<vmem>>, vector<1x32xf32>,
    } else {
    }
    %c0 = arith.constant 0 : index
    %c0_1 = arith.constant 0 : index
    %3 = vector.load %arg2[%c0, %c0_1] : memref<8x32xf32, #tpu.memory_space<vmem>>, vector<8x32xf32>
    %cst = arith.constant dense<0xFF800000> : vector<8xf32>
    %4 = vector.multi_reduction <maximumf>, %3, %cst [1] : vector<8x32xf32> to vector<8xf32>
    %5 = vector.shape_cast %4 : vector<8xf32> to vector<8x1xf32>
    %6 = vector.broadcast %5 : vector<8x1xf32> to vector<8x32xf32>
    %7 = arith.subf %3, %6 : vector<8x32xf32>
    %8 = math.exp %7 : vector<8x32xf32>
    %cst_2 = arith.constant dense<0.000000e+00> : vector<8xf32>
    %9 = vector.multi_reduction <add>, %8, %cst_2 [1] : vector<8x32xf32> to vector<8xf32>
    %10 = vector.shape_cast %9 : vector<8xf32> to vector<8x1xf32>
    %11 = tpu.reciprocal %10 : vector<8x1xf32> -> vector<8x1xf32>
    %12 = vector.broadcast %11 : vector<8x1xf32> to vector<8x32xf32>
    %13 = arith.mulf %8, %12 : vector<8x32xf32>
    %cst_3 = arith.constant 0.000000e+00 : f32
    %14 = vector.broadcast %cst_3 : f32 to vector<8x32xf32>
    %15 = arith.subf %14, %13 : vector<8x32xf32>
    %cst_4 = arith.constant 9.99999974E-6 : f32
    %16 = vector.broadcast %cst_4 : f32 to vector<8x32xf32>
    %17 = arith.addf %13, %16 : vector<8x32xf32>
    %18 = math.log %17 : vector<8x32xf32>
    %19 = arith.mulf %15, %18 : vector<8x32xf32>
    %c0_5 = arith.constant 0 : index
    %c0_6 = arith.constant 0 : index
    %20 = vector.load %arg5[%c0_5, %c0_6] : memref<1x32xf32, #tpu.memory_space<vmem>>, vector<1x32xf32>
    %cst_7 = arith.constant dense<0.000000e+00> : vector<32xf32>
    %21 = vector.multi_reduction <add>, %19, %cst_7 [0] : vector<8x32xf32> to vector<32xf32>
    %22 = vector.shape_cast %21 : vector<32xf32> to vector<1x32xf32>
    %23 = arith.addf %20, %22 : vector<1x32xf32>
    %c0_8 = arith.constant 0 : index
    %c0_9 = arith.constant 0 : index
    %24 = vector.load %arg5[%c0_8, %c0_9] : memref<1x32xf32, #tpu.memory_space<vmem>>, vector<1x32xf32>
    tpu.vector_store %arg5[%c0_8, %c0_9], %23 {strides = array<i32>} : memref<1x32xf32, #tpu.memory_space<vmem>>, vector<1x32xf32>,
    %c0_10 = arith.constant 0 : index
    %c0_11 = arith.constant 0 : index
    %25 = vector.load %arg6[%c0_10, %c0_11] : memref<1x32xf32, #tpu.memory_space<vmem>>, vector<1x32xf32>
    %cst_12 = arith.constant dense<0.000000e+00> : vector<32xf32>
    %26 = vector.multi_reduction <add>, %13, %cst_12 [0] : vector<8x32xf32> to vector<32xf32>
    %27 = vector.shape_cast %26 : vector<32xf32> to vector<1x32xf32>
    %28 = arith.addf %25, %27 : vector<1x32xf32>
    %c0_13 = arith.constant 0 : index
    %c0_14 = arith.constant 0 : index
    %29 = vector.load %arg6[%c0_13, %c0_14] : memref<1x32xf32, #tpu.memory_space<vmem>>, vector<1x32xf32>
    tpu.vector_store %arg6[%c0_13, %c0_14], %28 {strides = array<i32>} : memref<1x32xf32, #tpu.memory_space<vmem>>, vector<1x32xf32>,
    %c0_i32_15 = arith.constant 0 : i32
    %30 = arith.cmpi eq, %arg1, %c0_i32_15 : i32
    %31 = arith.extui %30 : i1 to i32
    %c0_i32_16 = arith.constant 0 : i32
    %32 = arith.cmpi ne, %31, %c0_i32_16 : i32
    scf.if %32 {
      %c0_17 = arith.constant 0 : index
      %c0_18 = arith.constant 0 : index
      %33 = vector.load %arg5[%c0_17, %c0_18] : memref<1x32xf32, #tpu.memory_space<vmem>>, vector<1x32xf32>
      %c0_19 = arith.constant 0 : index
      %c0_20 = arith.constant 0 : index
      %c0_21 = arith.constant 0 : index
      %34 = vector.load %arg3[%c0_19, %c0_20, %c0_21] : memref<1x1x32xf32, #tpu.memory_space<vmem>>, vector<1x1x32xf32>
      %35 = vector.shape_cast %34 : vector<1x1x32xf32> to vector<1x32xf32>
      %36 = vector.shape_cast %33 : vector<1x32xf32> to vector<1x1x32xf32>
      tpu.vector_store %arg3[%c0_19, %c0_20, %c0_21], %36 {strides = array<i32>} : memref<1x1x32xf32, #tpu.memory_space<vmem>>, vector<1x1x32xf32>,
      %c0_22 = arith.constant 0 : index
      %c0_23 = arith.constant 0 : index
      %37 = vector.load %arg6[%c0_22, %c0_23] : memref<1x32xf32, #tpu.memory_space<vmem>>, vector<1x32xf32>
      %c0_24 = arith.constant 0 : index
      %c0_25 = arith.constant 0 : index
      %c0_26 = arith.constant 0 : index
      %38 = vector.load %arg4[%c0_24, %c0_25, %c0_26] : memref<1x1x32xf32, #tpu.memory_space<vmem>>, vector<1x1x32xf32>
      %39 = vector.shape_cast %38 : vector<1x1x32xf32> to vector<1x32xf32>
      %40 = vector.shape_cast %37 : vector<1x32xf32> to vector<1x1x32xf32>
      tpu.vector_store %arg4[%c0_24, %c0_25, %c0_26], %40 {strides = array<i32>} : memref<1x1x32xf32, #tpu.memory_space<vmem>>, vector<1x1x32xf32>,
    } else {
    }
    return
  }
  func.func @transform_0(%arg0: i32, %arg1: i32) -> (i32, i32) {
    %c1_i32 = arith.constant 1 : i32
    %0 = arith.muli %arg0, %c1_i32 : i32
    %1 = arith.addi %0, %arg1 : i32
    %c0_i32 = arith.constant 0 : i32
    %2 = arith.minsi %1, %c0_i32 : i32
    %c0_i32_0 = arith.constant 0 : i32
    %c0_i32_1 = arith.constant 0 : i32
    return %2, %c0_i32_0 : i32, i32
  }
  func.func @transform_1(%arg0: i32, %arg1: i32) -> (i32, i32, i32) {
    %c0_i32 = arith.constant 0 : i32
    %c0_i32_0 = arith.constant 0 : i32
    %c0_i32_1 = arith.constant 0 : i32
    return %arg0, %c0_i32, %c0_i32_0 : i32, i32, i32
  }
  func.func @transform_2(%arg0: i32, %arg1: i32) -> (i32, i32, i32) {
    %c0_i32 = arith.constant 0 : i32
    %c0_i32_0 = arith.constant 0 : i32
    %c0_i32_1 = arith.constant 0 : i32
    return %arg0, %c0_i32, %c0_i32_0 : i32, i32, i32
  }
}

</mosaic_0001>

<llo_original>
// kernel: tpu_custom_call.1
$region0: #{tpu_custom_call.1}
  #allocation0 [shape = 'u32[]', space=smem, size = 0x4, offset = 0x4, fixed_abs, tag = 'smem constant byte address 0x4 - core index']
  #allocation1 [shape = 'u32[144,128]{1,0:T(1,128)}', space=vmem, size = 0x12000, scoped, tag = 'internal scratch']
  #allocation2 [shape = 'f32[1,32]{1,0:T(1,128)}', space=vmem, size = 0x200, scoped, tag = 'scratch operand']
  #allocation3 [shape = 'f32[1,32]{1,0:T(1,128)}', space=vmem, size = 0x200, scoped, tag = 'scratch operand']
  %s0 = inlined_call_operand.hbm [shape: f32[8,32], index: 0, kind: input, shape index: {}]
  %s1 = inlined_call_operand.hbm [shape: f32[1,1,32], index: 1, kind: output, shape index: {0}]
  %s2 = inlined_call_operand.hbm [shape: f32[1,1,32], index: 2, kind: output, shape index: {1}]
  %3 = xla_tuple %s1, %s2
  %s4 = sld [smem:[#allocation0]]
  $region34: #{tpu_custom_call.1} parent=0
    _
  %s6 = ssub.s32 1, %s4
  %s7 = scalar_select 0, %s6, %s4
  $region1: #{tpu_custom_call.1} parent=0
    #allocation4 [shape = 'u8[4096]{0}', space=vmem, size = 0x1000, scoped, tag = 'input window, operand 0, single buffered']
    #allocation5 [shape = 's32[1]{0}', space=sflag, size = 0x4, scoped, tag = 'scoped memory for tpu_custom_call.1']
    #allocation6 [shape = 's32[1]{0}', space=sflag, size = 0x4, scoped, tag = 'scoped memory for tpu_custom_call.1']
    #allocation7 [shape = 'u8[512]{0}', space=vmem, size = 0x400, scoped, tag = 'output window, operand 0, single buffered']
    #allocation8 [shape = 'u8[512]{0}', space=vmem, size = 0x400, scoped, tag = 'output window, operand 1, single buffered']
    #allocation9 [shape = 's32[1]{0}', space=sflag, size = 0x4, scoped, tag = 'scoped memory for tpu_custom_call.1']
    %8 = vsyncpa [#allocation5], 0
    %9 = vsyncpa [#allocation6], 0
    %10 = vsyncpa [#allocation9], 0
    // Predicated region
    $region2: #{tpu_custom_call.1} parent=1 // pred_check
      _
    $region3: #{tpu_custom_call.1} parent=1 // pred_check_branch
      %12 = sbr.rel (0) target = $region5
    $region4: #{tpu_custom_call.1} parent=1 // pred_region
      %s13 = sadd.s32 0, 0
      %p14 = scmp.lt.s32.totalorder %s13, 0
      %s15 = scalar_select %p14, %s13, 0
      %s17 = ssub.s32 128, 128
      %18 = vsyncadd [#allocation5], %s17
      %s19 = smul.addr %s15, 128
      %s20 = scalar_lea.hbm %s0, %s19
      %s22 = sshll.u32 [#allocation4], 4
      %s23 = int_to_ptr.vmem [resolvable:$true] %s22
      %25 = dma.hbm_to_vmem [thread:$0]  %s20, 128, %s23, [#allocation5]
    $region5: #{tpu_custom_call.1} parent=1 // pred_fallthru
      _
    // Predicated region
    $region6: #{tpu_custom_call.1} parent=1 // pred_check
      _
    $region7: #{tpu_custom_call.1} parent=1 // pred_check_branch
      %27 = sbr.rel (0) target = $region9
    $region8: #{tpu_custom_call.1} parent=1 // pred_region
      %28 = dma.done [#allocation5], 128
    $region9: #{tpu_custom_call.1} parent=1 // pred_fallthru
      _
    %s29 = sadd.s32 0, 0
    %p30 = scmp.lt.s32.totalorder %s29, 0
    %s31 = scalar_select %p30, %s29, 0
    %p32 = scmp.eq.s32.totalorder 0, 0
    // Predicated region
    $region10: #{tpu_custom_call.1} parent=1 // pred_check
      %p33 = pneg %p32
    $region11: #{tpu_custom_call.1} parent=1 // pred_check_branch
      %35 = sbr.rel (%p33) target = $region13
    $region12: #{tpu_custom_call.1} parent=1 // pred_region
      %vm36 = vcmask 253952
      %37 = vst.msk [vmem:[#allocation2] sm:$0x1] %vm36, 0.0
      %38 = vst.msk [vmem:[#allocation3] sm:$0x1] %vm36, 0.0
    $region13: #{tpu_custom_call.1} parent=1 // pred_fallthru
      _
    %v39 = vld [vmem:[#allocation4] sm:$0xff]
    %vm40 = vcmask 261120
    %v41 = vsel %vm40, %v39, -inf
    %42 = vmax.xlane.f32.xlu0 %v41
    %v43 = vpop.xlane.xlu0 %42
    %v44 = vsub.f32 %v39, %v43
    %v45 = vmul.f32 %v44, 1.442695
    %v46 = vpow.pop %v45
    %v47 = vsel %vm40, %v46, 0.0
    %48 = vadd.xlane.f32.xlu0 %v47
    %v49 = vpop.xlane.xlu0 %48
    %v50 = vrcp.pop %v49
    %v51 = vmul.f32 %v46, %v50
    %v52 = vsub.f32 0.0, %v51
    %v53 = vadd.f32 %v51, 1e-05
    %v54 = vlog2.pop %v53
    %v55 = vmul.f32 %v54, 0.6931472
    %v56 = vmul.f32 %v52, %v55
    %v57 = vld [vmem:[#allocation2] sm:$0x1]
    %v58 = vsel %vm40, %v56, 0.0
    %v59 = vrot.slane %v58, 4
    %v60 = vadd.f32 %v58, %v59
    %v61 = vrot.slane %v60, 2
    %v62 = vadd.f32 %v60, %v61
    %v63 = vrot.slane %v62, 1
    %v64 = vadd.f32 %v62, %v63
    %v65 = vadd.f32 %v57, %v64
    %vm66 = vcmask 253952
    %67 = vst.msk [vmem:[#allocation2] sm:$0x1] %vm66, %v65
    %v68 = vld [vmem:[#allocation3] sm:$0x1]
    %v69 = vsel %vm40, %v51, 0.0
    %v70 = vrot.slane %v69, 4
    %v71 = vadd.f32 %v69, %v70
    %v72 = vrot.slane %v71, 2
    %v73 = vadd.f32 %v71, %v72
    %v74 = vrot.slane %v73, 1
    %v75 = vadd.f32 %v73, %v74
    %v76 = vadd.f32 %v68, %v75
    %77 = vst.msk [vmem:[#allocation3] sm:$0x1] %vm66, %v76
    // Predicated region
    $region14: #{tpu_custom_call.1} parent=1 // pred_check
      %p78 = pneg %p32
    $region15: #{tpu_custom_call.1} parent=1 // pred_check_branch
      %80 = sbr.rel (%p78) target = $region17
    $region16: #{tpu_custom_call.1} parent=1 // pred_region
      %v81 = vld [vmem:[#allocation2] sm:$0x1]
      %82 = vst.msk [vmem:[#allocation7] sm:$0x1] %vm66, %v81
      %v83 = vld [vmem:[#allocation3] sm:$0x1]
      %84 = vst.msk [vmem:[#allocation8] sm:$0x1] %vm66, %v83
    $region17: #{tpu_custom_call.1} parent=1 // pred_fallthru
      _
    // Predicated region
    $region18: #{tpu_custom_call.1} parent=1 // pred_check
      _
    $region19: #{tpu_custom_call.1} parent=1 // pred_check_branch
      %86 = sbr.rel (0) target = $region21
    $region20: #{tpu_custom_call.1} parent=1 // pred_region
      %s88 = ssub.s32 16, 16
      %89 = vsyncadd [#allocation6], %s88
      %s91 = sshll.u32 [#allocation7], 4
      %s92 = int_to_ptr.vmem [resolvable:$true] %s91
      %94 = dma.vmem_to_hbm [thread:$0]  %s92, 16, %s1, [#allocation6]
    $region21: #{tpu_custom_call.1} parent=1 // pred_fallthru
      _
    // Predicated region
    $region22: #{tpu_custom_call.1} parent=1 // pred_check
      _
    $region23: #{tpu_custom_call.1} parent=1 // pred_check_branch
      %96 = sbr.rel (0) target = $region25
    $region24: #{tpu_custom_call.1} parent=1 // pred_region
      %s98 = ssub.s32 16, 16
      %99 = vsyncadd [#allocation9], %s98
      %s101 = sshll.u32 [#allocation8], 4
      %s102 = int_to_ptr.vmem [resolvable:$true] %s101
      %104 = dma.vmem_to_hbm [thread:$0]  %s102, 16, %s2, [#allocation9]
    $region25: #{tpu_custom_call.1} parent=1 // pred_fallthru
      _
    // Predicated region
    $region26: #{tpu_custom_call.1} parent=1 // pred_check
      _
    $region27: #{tpu_custom_call.1} parent=1 // pred_check_branch
      %106 = sbr.rel (0) target = $region29
    $region28: #{tpu_custom_call.1} parent=1 // pred_region
      %107 = dma.done [#allocation6], 16
    $region29: #{tpu_custom_call.1} parent=1 // pred_fallthru
      _
    // Predicated region
    $region30: #{tpu_custom_call.1} parent=1 // pred_check
      _
    $region31: #{tpu_custom_call.1} parent=1 // pred_check_branch
      %109 = sbr.rel (0) target = $region33
    $region32: #{tpu_custom_call.1} parent=1 // pred_region
      %110 = dma.done [#allocation9], 16
    $region33: #{tpu_custom_call.1} parent=1 // pred_fallthru
      _
    %111 = vsyncpa [#allocation5], 1
    %112 = vsyncpa [#allocation6], 1
    %113 = vsyncpa [#allocation9], 1

</llo_original>
